<compile_context>
chip_gen: v7x
topology: tpu7x:2x2x1
jax: 0.10.0
libtpu: 0.0.40
codegen_flags: <defaults>
</compile_context>

<pallas_src>
import jax
import jax.numpy as jnp
from jax.experimental import pallas as pl
from jax.experimental.pallas import tpu as pltpu


def _elementwise_kernel(x_ref, o_ref):
    # Faithful op order of the PyTorch module (compute in f32; memory-bound,
    # so the extra VPU ops are free).
    x = x_ref[...].astype(jnp.float32)
    y = ((x + 2.0) * 3.0 - 1.0) * 0.5
    o_ref[...] = (y * y).astype(o_ref.dtype)


def _vmem_limit_bytes():
    # Generation-aware VMEM budget: half of physical capacity
    #   v7x (64 MiB/TC)  -> 32 MiB scoped
    #   v5e/v6e (128 MiB) -> 64 MiB scoped
    try:
        cap = int(pltpu.get_tpu_info().vmem_capacity_bytes)
    except Exception:
        cap = 64 * 1024 * 1024  # conservative default (v7x per-TC physical)
    return max(32 * 1024 * 1024, min(cap // 2, 64 * 1024 * 1024))


def _jnp_ref_f32(v):
    y = ((v.astype(jnp.float32) + 2.0) * 3.0 - 1.0) * 0.5
    return y * y


def pt_module_forward(x):
    """Pallas implementation of PtModule.forward. Accepts any shape / float dtype."""
    orig_shape = x.shape
    orig_dtype = x.dtype
    n = x.size
    itemsize = jnp.dtype(orig_dtype).itemsize
    # dtype-aware sublane multiple: 8 for f32, 16 for bf16, 32 for int8/fp8
    sub = max(8, 32 // itemsize)

    flat = jnp.ravel(x)  # metadata-only reshape; no dtype conversion in the wrapper

    # Widest lane-dense slab width that divides n.  The (8,128) divisibility
    # constraint applies to block_shape (not the array), so rows need NOT be a
    # multiple of `sub`: a ragged final row-tile is handled by the grid cdiv
    # (OOB reads are garbage, writes are masked) -- safe for this elementwise op.
    lane = 128
    for cand in (1024, 512, 256):
        if n % cand == 0:
            lane = cand
            break

    m = (n // lane) * lane  # bulk handled by the kernel
    tail = n - m            # < 128 leftover elements (only when n % 128 != 0)

    if m == 0:
        # Tensor smaller than one lane row: not worth a kernel launch.
        return _jnp_ref_f32(flat).astype(orig_dtype).reshape(orig_shape)

    bulk = flat[:m] if tail else flat  # identity (no copy) on the fast path
    rows = m // lane
    x2d = bulk.reshape(rows, lane)

    # Block sizing (generation-aware):
    #   * ~4 MiB blocks amortize the ~0.35 us per-grid-step overhead
    #     (in + out double-buffered ~16 MiB, inside the 32 MiB v7x scoped limit)
    #   * force >= ~4 grid steps for DMA/compute overlap and dual-TC sharding
    #     on v7x, but never shrink blocks below ~512 KiB.
    max_block_bytes = 4 * 1024 * 1024
    min_block_bytes = 512 * 1024
    bytes_per_row = lane * itemsize
    max_tile_rows = max(sub, (max_block_bytes // bytes_per_row) // sub * sub)

    tile_rows = min(rows, max_tile_rows)
    quarter_rows = (rows // 4) // sub * sub
    if quarter_rows >= sub and quarter_rows * bytes_per_row >= min_block_bytes:
        tile_rows = min(tile_rows, quarter_rows)
    # tile_rows is either == rows (block == full array) or a multiple of `sub`,
    # so the block_shape is always layout-legal.

    grid = (pl.cdiv(rows, tile_rows),)

    out2d = pl.pallas_call(
        _elementwise_kernel,
        out_shape=jax.ShapeDtypeStruct((rows, lane), orig_dtype),
        grid=grid,
        in_specs=[pl.BlockSpec((tile_rows, lane), lambda i: (i, 0))],
        out_specs=pl.BlockSpec((tile_rows, lane), lambda i: (i, 0)),
        compiler_params=pltpu.CompilerParams(
            # row-tiles are independent -> shard across both TCs on v7x;
            # harmless on single-TC v5e/v6e.
            dimension_semantics=("parallel",),
            vmem_limit_bytes=_vmem_limit_bytes(),
        ),
        cost_estimate=pl.CostEstimate(
            flops=5 * m,
            transcendentals=0,
            bytes_accessed=2 * m * itemsize,
        ),
    )(x2d)
    # TODO(synk): optionally sweep pipeline_mode=pl.Buffered(3) on the input
    # BlockSpec; low-single-digit % at best for this memory-bound op.

    out_flat = out2d.reshape(-1)
    if tail:
        # Ragged shapes only (n % 128 != 0): the <128-element tail is computed
        # with plain XLA and concatenated (one extra output copy, bounded cost).
        tail_out = _jnp_ref_f32(flat[m:]).astype(orig_dtype)
        out_flat = jnp.concatenate([out_flat, tail_out])
    return out_flat.reshape(orig_shape)


if __name__ == "__main__":
    key = jax.random.PRNGKey(0)

    # Primary test: NCHW tensor matching the module's typical usage.
    x = jax.random.normal(key, (2, 4, 16, 16), dtype=jnp.float32)
    out = pt_module_forward(x)
    jax.block_until_ready(out)
    ref = (((x + 2.0) * 3.0 - 1.0) / 2.0) ** 2
    assert out.shape == x.shape and out.dtype == x.dtype
    assert jnp.allclose(out, ref, atol=1e-5, rtol=1e-5)

    # Secondary test: ragged shape (n not a multiple of 128) exercising the
    # no-pad fallback path.
    x2 = jax.random.normal(jax.random.PRNGKey(1), (2, 3, 100), dtype=jnp.float32)
    out2 = pt_module_forward(x2)
    jax.block_until_ready(out2)
    ref2 = (((x2 + 2.0) * 3.0 - 1.0) / 2.0) ** 2
    assert out2.shape == x2.shape and out2.dtype == x2.dtype
    assert jnp.allclose(out2, ref2, atol=1e-5, rtol=1e-5)

    print("KERNEL_OK")
</pallas_src>

<mosaic_0001>
module attributes {stable_mosaic.version = 11 : i64} {
  func.func @_elementwise_kernel(%arg0: i32, %arg1: memref<2x1024xf32, #tpu.memory_space<vmem>>, %arg2: memref<2x1024xf32, #tpu.memory_space<vmem>>) attributes {dimension_semantics = [#tpu.dimension_semantics<parallel>], iteration_bounds = array<i64: 1>, scalar_prefetch = 0 : i64, scratch_operands = 0 : i64, tpu.core_type = #tpu.core_type<tc>, window_params = [{transform_indices = @transform_0, window_bounds = array<i64: 2, 1024>}, {transform_indices = @transform_1, window_bounds = array<i64: 2, 1024>}]} {
    %c0 = arith.constant 0 : index
    %c0_0 = arith.constant 0 : index
    %0 = vector.load %arg1[%c0, %c0_0] : memref<2x1024xf32, #tpu.memory_space<vmem>>, vector<2x1024xf32>
    %cst = arith.constant 2.000000e+00 : f32
    %1 = vector.broadcast %cst : f32 to vector<2x1024xf32>
    %2 = arith.addf %0, %1 : vector<2x1024xf32>
    %cst_1 = arith.constant 3.000000e+00 : f32
    %3 = vector.broadcast %cst_1 : f32 to vector<2x1024xf32>
    %4 = arith.mulf %2, %3 : vector<2x1024xf32>
    %cst_2 = arith.constant 1.000000e+00 : f32
    %5 = vector.broadcast %cst_2 : f32 to vector<2x1024xf32>
    %6 = arith.subf %4, %5 : vector<2x1024xf32>
    %cst_3 = arith.constant 5.000000e-01 : f32
    %7 = vector.broadcast %cst_3 : f32 to vector<2x1024xf32>
    %8 = arith.mulf %6, %7 : vector<2x1024xf32>
    %9 = arith.mulf %8, %8 : vector<2x1024xf32>
    %c0_4 = arith.constant 0 : index
    %c0_5 = arith.constant 0 : index
    %10 = vector.load %arg2[%c0_4, %c0_5] : memref<2x1024xf32, #tpu.memory_space<vmem>>, vector<2x1024xf32>
    tpu.vector_store %arg2[%c0_4, %c0_5], %9 {strides = array<i32>} : memref<2x1024xf32, #tpu.memory_space<vmem>>, vector<2x1024xf32>,
    return
  }
  func.func @transform_0(%arg0: i32) -> (i32, i32) {
    %c0_i32 = arith.constant 0 : i32
    %c0_i32_0 = arith.constant 0 : i32
    return %arg0, %c0_i32 : i32, i32
  }
  func.func @transform_1(%arg0: i32) -> (i32, i32) {
    %c0_i32 = arith.constant 0 : i32
    %c0_i32_0 = arith.constant 0 : i32
    return %arg0, %c0_i32 : i32, i32
  }
}

</mosaic_0001>

<llo_original>
// kernel: tpu_custom_call.1
$region0: #{tpu_custom_call.1}
  #allocation0 [shape = 'u32[]', space=smem, size = 0x4, offset = 0x4, fixed_abs, tag = 'smem constant byte address 0x4 - core index']
  #allocation1 [shape = 'u32[144,128]{1,0:T(1,128)}', space=vmem, size = 0x12000, scoped, tag = 'internal scratch']
  %s0 = inlined_call_operand.hbm [shape: f32[2,1024], index: 0, kind: input, shape index: {}]
  %s1 = inlined_call_operand.hbm [shape: f32[2,1024], index: 1, kind: output, shape index: {}]
  %s2 = sld [smem:[#allocation0]]
  $region18: #{tpu_custom_call.1} parent=0
    _
  %s4 = ssub.s32 1, %s2
  %s5 = scalar_select 0, %s4, %s2
  $region1: #{tpu_custom_call.1} parent=0
    #allocation2 [shape = 'u8[8192]{0}', space=vmem, size = 0x2000, scoped, tag = 'input window, operand 0, single buffered']
    #allocation3 [shape = 's32[1]{0}', space=sflag, size = 0x4, scoped, tag = 'scoped memory for tpu_custom_call.1']
    #allocation4 [shape = 's32[1]{0}', space=sflag, size = 0x4, scoped, tag = 'scoped memory for tpu_custom_call.1']
    #allocation5 [shape = 'u8[8192]{0}', space=vmem, size = 0x2000, scoped, tag = 'output window, operand 0, single buffered']
    %6 = vsyncpa [#allocation3], 0
    %7 = vsyncpa [#allocation4], 0
    // Predicated region
    $region2: #{tpu_custom_call.1} parent=1 // pred_check
      _
    $region3: #{tpu_custom_call.1} parent=1 // pred_check_branch
      %9 = sbr.rel (0) target = $region5
    $region4: #{tpu_custom_call.1} parent=1 // pred_region
      %s11 = ssub.s32 256, 256
      %12 = vsyncadd [#allocation3], %s11
      %s14 = sshll.u32 [#allocation2], 4
      %s15 = int_to_ptr.vmem [resolvable:$true] %s14
      %17 = dma.hbm_to_vmem [thread:$0]  %s0, 256, %s15, [#allocation3]
    $region5: #{tpu_custom_call.1} parent=1 // pred_fallthru
      _
    // Predicated region
    $region6: #{tpu_custom_call.1} parent=1 // pred_check
      _
    $region7: #{tpu_custom_call.1} parent=1 // pred_check_branch
      %19 = sbr.rel (0) target = $region9
    $region8: #{tpu_custom_call.1} parent=1 // pred_region
      %20 = dma.done [#allocation3], 256
    $region9: #{tpu_custom_call.1} parent=1 // pred_fallthru
      _
    %v21 = vld [vmem:[#allocation2] sm:$0xff]
    %v22 = vld [vmem:[#allocation2 + $0x8] sm:$0xff]
    %v23 = vadd.f32 %v21, 2.0
    %v24 = vadd.f32 %v22, 2.0
    %v25 = vmul.f32 %v23, 3.0
    %v26 = vmul.f32 %v24, 3.0
    %v27 = vsub.f32 %v25, 1.0
    %v28 = vsub.f32 %v26, 1.0
    %v29 = vmul.f32 %v27, 0.5
    %v30 = vmul.f32 %v28, 0.5
    %v31 = vmul.f32 %v29, %v29
    %v32 = vmul.f32 %v30, %v30
    %33 = vst [vmem:[#allocation5] sm:$0xff] %v31
    %34 = vst [vmem:[#allocation5 + $0x8] sm:$0xff] %v32
    // Predicated region
    $region10: #{tpu_custom_call.1} parent=1 // pred_check
      _
    $region11: #{tpu_custom_call.1} parent=1 // pred_check_branch
      %36 = sbr.rel (0) target = $region13
    $region12: #{tpu_custom_call.1} parent=1 // pred_region
      %s38 = ssub.s32 256, 256
      %39 = vsyncadd [#allocation4], %s38
      %s41 = sshll.u32 [#allocation5], 4
      %s42 = int_to_ptr.vmem [resolvable:$true] %s41
      %44 = dma.vmem_to_hbm [thread:$0]  %s42, 256, %s1, [#allocation4]
    $region13: #{tpu_custom_call.1} parent=1 // pred_fallthru
      _
    // Predicated region
    $region14: #{tpu_custom_call.1} parent=1 // pred_check
      _
    $region15: #{tpu_custom_call.1} parent=1 // pred_check_branch
      %46 = sbr.rel (0) target = $region17
    $region16: #{tpu_custom_call.1} parent=1 // pred_region
      %47 = dma.done [#allocation4], 256
    $region17: #{tpu_custom_call.1} parent=1 // pred_fallthru
      _
    %48 = vsyncpa [#allocation3], 1
    %49 = vsyncpa [#allocation4], 1

</llo_original>
